<compile_context>
chip_gen: v7x
topology: tpu7x:2x2x1
jax: 0.10.0
libtpu: 0.0.40
codegen_flags: <defaults>
</compile_context>

<pallas_src>
import functools

import jax
import jax.numpy as jnp
from jax.experimental import pallas as pl
from jax.experimental.pallas import tpu as pltpu


def _round_up(x, m):
    return ((x + m - 1) // m) * m


def _cdiv(a, b):
    return -(-a // b)


def _policy_kernel(*refs, n_layers, action_dim):
    """Fused policy forward for one batch tile.

    refs = (x_ref, w0_ref, b0_ref, ..., w_{L-1}_ref, b_{L-1}_ref, out_ref)
      x_ref:  [TB, feat]            bf16  (streamed per grid step)
      w_ref:  [in_l, out_pad_l]     bf16  (VMEM-resident across the batch grid)
      b_ref:  [1, out_pad_l]        f32
      out_ref:[TB, action_dim]      f32   (narrow, lane-masked store; tiny writeback)
    Layers 0..L-2 are Linear+ReLU (MLP extractor); layer L-1 is the action_net (no ReLU).
    """
    x_ref = refs[0]
    out_ref = refs[-1]
    params = refs[1:-1]

    h = x_ref[...]                                   # bf16 obs tile, fed straight to MXU
    for layer in range(n_layers):
        w_ref = params[2 * layer]
        b_ref = params[2 * layer + 1]
        acc = jnp.dot(h, w_ref[...], preferred_element_type=jnp.float32)
        act = acc + b_ref[...]                       # f32 epilogue on the VPU
        if layer < n_layers - 1:
            act = jnp.maximum(act, 0.0)              # ReLU on hidden layers only
            h = act.astype(jnp.bfloat16)             # bf16 LHS for next MXU matmul
        else:
            h = act                                  # action head: no activation
    # Store only the real action lanes (avoids 32x padded f32 writeback).
    out_ref[...] = h[:, :action_dim].astype(out_ref.dtype)


def prepare_policy_params(weights, biases):
    """Pad/cast parameters ONCE; cache the result across forward calls.

    weights: list of [in_i, out_i] arrays (last entry = action_net weight)
    biases:  list of [out_i] arrays
    """
    assert len(weights) == len(biases) and len(weights) >= 1
    feat = int(weights[0].shape[0])
    w_pad, b_pad = [], []
    for li, (w, b) in enumerate(zip(weights, biases)):
        in_d, out_d = int(w.shape[0]), int(w.shape[1])
        # First-layer K stays at the true feature width (matches unpadded obs tile);
        # every output width is padded to a 128-lane multiple so activations stay dense.
        ip = in_d if li == 0 else _round_up(in_d, 128)
        op = _round_up(out_d, 128)
        wp = jnp.zeros((ip, op), jnp.bfloat16).at[:in_d, :out_d].set(
            w.astype(jnp.bfloat16))
        bp = jnp.zeros((1, op), jnp.float32).at[0, :out_d].set(
            b.astype(jnp.float32))
        w_pad.append(wp)
        b_pad.append(bp)
    action_dim = int(weights[-1].shape[1])
    return {"w_pad": w_pad, "b_pad": b_pad, "feat": feat, "action_dim": action_dim}


def apg_policy_forward(obs, prepared, *, tb_max=512):
    """Fused BaseApgPolicy forward.

    obs:      [B, features_dim] float32
    prepared: output of prepare_policy_params (cached padded bf16 weights / f32 biases)
    returns:  [B, action_dim] float32
    """
    w_pad, b_pad = prepared["w_pad"], prepared["b_pad"]
    feat, action_dim = prepared["feat"], prepared["action_dim"]
    n_layers = len(w_pad)

    batch = int(obs.shape[0])
    assert int(obs.shape[1]) == feat

    # ---- balanced batch tiling ----
    # Minimize padded rows, amortize ~0.35us/step overhead, and give >=2 grid steps
    # (when batch allows) so a v7x chip can shard the batch across both TensorCores.
    n_tiles = max(1, _cdiv(batch, tb_max))
    if n_tiles == 1 and batch > 16:
        n_tiles = 2
    tb = _round_up(_cdiv(batch, n_tiles), 16)
    grid_b = _cdiv(batch, tb)
    batch_pad = grid_b * tb

    # obs streamed as bf16 (half the HBM->VMEM bytes); pad batch rows only if needed.
    obs_bf = obs.astype(jnp.bfloat16)
    if batch_pad != batch:
        obs_bf = jnp.pad(obs_bf, ((0, batch_pad - batch), (0, 0)))

    in_specs = [pl.BlockSpec((tb, feat), lambda i: (i, 0))]
    # Weights/biases: constant index_map -> resident in VMEM across all grid steps.
    for wp, bp in zip(w_pad, b_pad):
        in_specs.append(pl.BlockSpec(wp.shape, lambda i: (0, 0)))
        in_specs.append(pl.BlockSpec(bp.shape, lambda i: (0, 0)))
    out_spec = pl.BlockSpec((tb, action_dim), lambda i: (i, 0))

    flops = 2 * batch_pad * sum(int(w.shape[0]) * int(w.shape[1]) for w in w_pad)
    bytes_accessed = (
        obs_bf.size * 2
        + sum(int(w.size) * 2 + int(b.size) * 4 for w, b in zip(w_pad, b_pad))
        + batch_pad * action_dim * 4)

    kernel = functools.partial(_policy_kernel, n_layers=n_layers, action_dim=action_dim)

    args = [obs_bf]
    for wp, bp in zip(w_pad, b_pad):
        args.append(wp)
        args.append(bp)

    out = pl.pallas_call(
        kernel,
        out_shape=jax.ShapeDtypeStruct((batch_pad, action_dim), jnp.float32),
        grid=(grid_b,),
        in_specs=in_specs,
        out_specs=out_spec,
        compiler_params=pltpu.CompilerParams(
            dimension_semantics=("parallel",)),
        cost_estimate=pl.CostEstimate(
            flops=int(flops), transcendentals=0, bytes_accessed=int(bytes_accessed)),
    )(*args)

    return out[:batch] if batch_pad != batch else out


def init_policy_params(key, features_dim, net_arch, action_dim):
    """nn.Linear-style init; weights stored transposed as [in, out]."""
    weights, biases = [], []
    in_dim = features_dim
    for out_dim in list(net_arch) + [action_dim]:
        key, wk, bk = jax.random.split(key, 3)
        bound = 1.0 / jnp.sqrt(in_dim)
        w = jax.random.uniform(wk, (in_dim, out_dim), jnp.float32, -bound, bound)
        b = jax.random.uniform(bk, (out_dim,), jnp.float32, -bound, bound)
        weights.append(w)
        biases.append(b)
        in_dim = out_dim
    return weights, biases


def apg_policy_ref_f32(obs, weights, biases):
    """Pure-JAX f32 reference (exact module semantics)."""
    h = obs
    for i, (w, b) in enumerate(zip(weights, biases)):
        h = h @ w + b
        if i < len(weights) - 1:
            h = jnp.maximum(h, 0.0)
    return h


def apg_policy_ref_bf16(obs, weights, biases):
    """Reference mimicking the kernel's bf16-operand / f32-accumulate matmuls."""
    h = obs.astype(jnp.float32)
    for i, (w, b) in enumerate(zip(weights, biases)):
        h = jnp.dot(h.astype(jnp.bfloat16), w.astype(jnp.bfloat16),
                    preferred_element_type=jnp.float32) + b
        if i < len(weights) - 1:
            h = jnp.maximum(h, 0.0)
    return h


if __name__ == "__main__":
    # Small shapes consistent with the module defaults:
    #   features_dim=96 state vector, net_arch=[128,128,128], action_dim=4.
    batch = 64
    features_dim = 96
    net_arch = [128, 128, 128]   # BaseApgPolicy default mlp_extractor_kwargs
    action_dim = 4               # action_net output

    key = jax.random.PRNGKey(0)
    key, obs_key = jax.random.split(key)
    obs = jax.random.normal(obs_key, (batch, features_dim), dtype=jnp.float32)

    weights, biases = init_policy_params(key, features_dim, net_arch, action_dim)
    prepared = prepare_policy_params(weights, biases)   # pad/cast once, reuse every call

    out = apg_policy_forward(obs, prepared)
    out = jax.block_until_ready(out)

    assert out.shape == (batch, action_dim)

    ref_bf16 = apg_policy_ref_bf16(obs, weights, biases)
    ref_f32 = apg_policy_ref_f32(obs, weights, biases)
    assert jnp.allclose(out, ref_bf16, atol=2e-2, rtol=2e-2), "mismatch vs bf16 reference"
    assert jnp.allclose(out, ref_f32, atol=8e-2, rtol=8e-2), "mismatch vs f32 reference"

    print("KERNEL_OK")
</pallas_src>

<mosaic_0001>
module attributes {stable_mosaic.version = 11 : i64} {
  func.func @_policy_kernel(%arg0: i32, %arg1: memref<32x96xbf16, #tpu.memory_space<vmem>>, %arg2: memref<96x128xbf16, #tpu.memory_space<vmem>>, %arg3: memref<1x128xf32, #tpu.memory_space<vmem>>, %arg4: memref<128x128xbf16, #tpu.memory_space<vmem>>, %arg5: memref<1x128xf32, #tpu.memory_space<vmem>>, %arg6: memref<128x128xbf16, #tpu.memory_space<vmem>>, %arg7: memref<1x128xf32, #tpu.memory_space<vmem>>, %arg8: memref<128x128xbf16, #tpu.memory_space<vmem>>, %arg9: memref<1x128xf32, #tpu.memory_space<vmem>>, %arg10: memref<32x4xf32, #tpu.memory_space<vmem>>) attributes {dimension_semantics = [#tpu.dimension_semantics<parallel>], iteration_bounds = array<i64: 2>, scalar_prefetch = 0 : i64, scratch_operands = 0 : i64, tpu.core_type = #tpu.core_type<tc>, window_params = [{transform_indices = @transform_0, window_bounds = array<i64: 32, 96>}, {pipeline_mode = #tpu.pipeline_mode<synchronous>, transform_indices = @transform_1, window_bounds = array<i64: 96, 128>}, {pipeline_mode = #tpu.pipeline_mode<synchronous>, transform_indices = @transform_2, window_bounds = array<i64: 1, 128>}, {pipeline_mode = #tpu.pipeline_mode<synchronous>, transform_indices = @transform_3, window_bounds = array<i64: 128, 128>}, {pipeline_mode = #tpu.pipeline_mode<synchronous>, transform_indices = @transform_4, window_bounds = array<i64: 1, 128>}, {pipeline_mode = #tpu.pipeline_mode<synchronous>, transform_indices = @transform_5, window_bounds = array<i64: 128, 128>}, {pipeline_mode = #tpu.pipeline_mode<synchronous>, transform_indices = @transform_6, window_bounds = array<i64: 1, 128>}, {pipeline_mode = #tpu.pipeline_mode<synchronous>, transform_indices = @transform_7, window_bounds = array<i64: 128, 128>}, {pipeline_mode = #tpu.pipeline_mode<synchronous>, transform_indices = @transform_8, window_bounds = array<i64: 1, 128>}, {transform_indices = @transform_9, window_bounds = array<i64: 32, 4>}]} {
    %c0 = arith.constant 0 : index
    %c0_0 = arith.constant 0 : index
    %0 = vector.load %arg1[%c0, %c0_0] : memref<32x96xbf16, #tpu.memory_space<vmem>>, vector<32x96xbf16>
    %c0_1 = arith.constant 0 : index
    %c0_2 = arith.constant 0 : index
    %1 = vector.load %arg2[%c0_1, %c0_2] : memref<96x128xbf16, #tpu.memory_space<vmem>>, vector<96x128xbf16>
    %cst = arith.constant dense<0.000000e+00> : vector<32x128xf32>
    %2 = tpu.matmul %0, %1, %cst {dimension_numbers = #tpu.dot_dimension_numbers<[1], [0], [0], [1], [0, 0, 1, 1], [], []>} : vector<32x96xbf16>, vector<96x128xbf16>, vector<32x128xf32> -> vector<32x128xf32>
    %c0_3 = arith.constant 0 : index
    %c0_4 = arith.constant 0 : index
    %3 = vector.load %arg3[%c0_3, %c0_4] : memref<1x128xf32, #tpu.memory_space<vmem>>, vector<1x128xf32>
    %4 = vector.broadcast %3 : vector<1x128xf32> to vector<32x128xf32>
    %5 = arith.addf %2, %4 : vector<32x128xf32>
    %cst_5 = arith.constant 0.000000e+00 : f32
    %6 = vector.broadcast %cst_5 : f32 to vector<32x128xf32>
    %7 = arith.maximumf %5, %6 : vector<32x128xf32>
    %8 = arith.truncf %7 : vector<32x128xf32> to vector<32x128xbf16>
    %c0_6 = arith.constant 0 : index
    %c0_7 = arith.constant 0 : index
    %9 = vector.load %arg4[%c0_6, %c0_7] : memref<128x128xbf16, #tpu.memory_space<vmem>>, vector<128x128xbf16>
    %cst_8 = arith.constant dense<0.000000e+00> : vector<32x128xf32>
    %10 = tpu.matmul %8, %9, %cst_8 {dimension_numbers = #tpu.dot_dimension_numbers<[1], [0], [0], [1], [0, 0, 1, 1], [], []>} : vector<32x128xbf16>, vector<128x128xbf16>, vector<32x128xf32> -> vector<32x128xf32>
    %c0_9 = arith.constant 0 : index
    %c0_10 = arith.constant 0 : index
    %11 = vector.load %arg5[%c0_9, %c0_10] : memref<1x128xf32, #tpu.memory_space<vmem>>, vector<1x128xf32>
    %12 = vector.broadcast %11 : vector<1x128xf32> to vector<32x128xf32>
    %13 = arith.addf %10, %12 : vector<32x128xf32>
    %cst_11 = arith.constant 0.000000e+00 : f32
    %14 = vector.broadcast %cst_11 : f32 to vector<32x128xf32>
    %15 = arith.maximumf %13, %14 : vector<32x128xf32>
    %16 = arith.truncf %15 : vector<32x128xf32> to vector<32x128xbf16>
    %c0_12 = arith.constant 0 : index
    %c0_13 = arith.constant 0 : index
    %17 = vector.load %arg6[%c0_12, %c0_13] : memref<128x128xbf16, #tpu.memory_space<vmem>>, vector<128x128xbf16>
    %cst_14 = arith.constant dense<0.000000e+00> : vector<32x128xf32>
    %18 = tpu.matmul %16, %17, %cst_14 {dimension_numbers = #tpu.dot_dimension_numbers<[1], [0], [0], [1], [0, 0, 1, 1], [], []>} : vector<32x128xbf16>, vector<128x128xbf16>, vector<32x128xf32> -> vector<32x128xf32>
    %c0_15 = arith.constant 0 : index
    %c0_16 = arith.constant 0 : index
    %19 = vector.load %arg7[%c0_15, %c0_16] : memref<1x128xf32, #tpu.memory_space<vmem>>, vector<1x128xf32>
    %20 = vector.broadcast %19 : vector<1x128xf32> to vector<32x128xf32>
    %21 = arith.addf %18, %20 : vector<32x128xf32>
    %cst_17 = arith.constant 0.000000e+00 : f32
    %22 = vector.broadcast %cst_17 : f32 to vector<32x128xf32>
    %23 = arith.maximumf %21, %22 : vector<32x128xf32>
    %24 = arith.truncf %23 : vector<32x128xf32> to vector<32x128xbf16>
    %c0_18 = arith.constant 0 : index
    %c0_19 = arith.constant 0 : index
    %25 = vector.load %arg8[%c0_18, %c0_19] : memref<128x128xbf16, #tpu.memory_space<vmem>>, vector<128x128xbf16>
    %cst_20 = arith.constant dense<0.000000e+00> : vector<32x128xf32>
    %26 = tpu.matmul %24, %25, %cst_20 {dimension_numbers = #tpu.dot_dimension_numbers<[1], [0], [0], [1], [0, 0, 1, 1], [], []>} : vector<32x128xbf16>, vector<128x128xbf16>, vector<32x128xf32> -> vector<32x128xf32>
    %c0_21 = arith.constant 0 : index
    %c0_22 = arith.constant 0 : index
    %27 = vector.load %arg9[%c0_21, %c0_22] : memref<1x128xf32, #tpu.memory_space<vmem>>, vector<1x128xf32>
    %28 = vector.broadcast %27 : vector<1x128xf32> to vector<32x128xf32>
    %29 = arith.addf %26, %28 : vector<32x128xf32>
    %30 = vector.extract_strided_slice %29 {offsets = [0, 0], sizes = [32, 4], strides = [1, 1]} : vector<32x128xf32> to vector<32x4xf32>
    %c0_23 = arith.constant 0 : index
    %c0_24 = arith.constant 0 : index
    %31 = vector.load %arg10[%c0_23, %c0_24] : memref<32x4xf32, #tpu.memory_space<vmem>>, vector<32x4xf32>
    tpu.vector_store %arg10[%c0_23, %c0_24], %30 {strides = array<i32>} : memref<32x4xf32, #tpu.memory_space<vmem>>, vector<32x4xf32>,
    return
  }
  func.func @transform_0(%arg0: i32) -> (i32, i32) {
    %c0_i32 = arith.constant 0 : i32
    %c0_i32_0 = arith.constant 0 : i32
    return %arg0, %c0_i32 : i32, i32
  }
  func.func @transform_1(%arg0: i32) -> (i32, i32) {
    %c0_i32 = arith.constant 0 : i32
    %c0_i32_0 = arith.constant 0 : i32
    %c0_i32_1 = arith.constant 0 : i32
    return %c0_i32, %c0_i32_0 : i32, i32
  }
  func.func @transform_2(%arg0: i32) -> (i32, i32) {
    %c0_i32 = arith.constant 0 : i32
    %c0_i32_0 = arith.constant 0 : i32
    %c0_i32_1 = arith.constant 0 : i32
    return %c0_i32, %c0_i32_0 : i32, i32
  }
  func.func @transform_3(%arg0: i32) -> (i32, i32) {
    %c0_i32 = arith.constant 0 : i32
    %c0_i32_0 = arith.constant 0 : i32
    %c0_i32_1 = arith.constant 0 : i32
    return %c0_i32, %c0_i32_0 : i32, i32
  }
  func.func @transform_4(%arg0: i32) -> (i32, i32) {
    %c0_i32 = arith.constant 0 : i32
    %c0_i32_0 = arith.constant 0 : i32
    %c0_i32_1 = arith.constant 0 : i32
    return %c0_i32, %c0_i32_0 : i32, i32
  }
  func.func @transform_5(%arg0: i32) -> (i32, i32) {
    %c0_i32 = arith.constant 0 : i32
    %c0_i32_0 = arith.constant 0 : i32
    %c0_i32_1 = arith.constant 0 : i32
    return %c0_i32, %c0_i32_0 : i32, i32
  }
  func.func @transform_6(%arg0: i32) -> (i32, i32) {
    %c0_i32 = arith.constant 0 : i32
    %c0_i32_0 = arith.constant 0 : i32
    %c0_i32_1 = arith.constant 0 : i32
    return %c0_i32, %c0_i32_0 : i32, i32
  }
  func.func @transform_7(%arg0: i32) -> (i32, i32) {
    %c0_i32 = arith.constant 0 : i32
    %c0_i32_0 = arith.constant 0 : i32
    %c0_i32_1 = arith.constant 0 : i32
    return %c0_i32, %c0_i32_0 : i32, i32
  }
  func.func @transform_8(%arg0: i32) -> (i32, i32) {
    %c0_i32 = arith.constant 0 : i32
    %c0_i32_0 = arith.constant 0 : i32
    %c0_i32_1 = arith.constant 0 : i32
    return %c0_i32, %c0_i32_0 : i32, i32
  }
  func.func @transform_9(%arg0: i32) -> (i32, i32) {
    %c0_i32 = arith.constant 0 : i32
    %c0_i32_0 = arith.constant 0 : i32
    return %arg0, %c0_i32 : i32, i32
  }
}

</mosaic_0001>

<llo_original>
// kernel: tpu_custom_call.1
$region0: #{tpu_custom_call.1}
  #allocation0 [shape = 'u32[]', space=smem, size = 0x4, offset = 0x4, fixed_abs, tag = 'smem constant byte address 0x4 - core index']
  #allocation1 [shape = 'u32[144,128]{1,0:T(1,128)}', space=vmem, size = 0x12000, scoped, tag = 'internal scratch']
  %s0 = inlined_call_operand.hbm [shape: bf16[64,96], index: 0, kind: input, shape index: {}]
  %s1 = inlined_call_operand.hbm [shape: bf16[96,128], index: 1, kind: input, shape index: {}]
  %s2 = inlined_call_operand.vmem [shape: f32[1,128], index: 2, kind: input, shape index: {}]
  %s3 = inlined_call_operand.hbm [shape: bf16[128,128], index: 3, kind: input, shape index: {}]
  %s4 = inlined_call_operand.vmem [shape: f32[1,128], index: 4, kind: input, shape index: {}]
  %s5 = inlined_call_operand.hbm [shape: bf16[128,128], index: 5, kind: input, shape index: {}]
  %s6 = inlined_call_operand.vmem [shape: f32[1,128], index: 6, kind: input, shape index: {}]
  %s7 = inlined_call_operand.hbm [shape: bf16[128,128], index: 7, kind: input, shape index: {}]
  %s8 = inlined_call_operand.vmem [shape: f32[1,128], index: 8, kind: input, shape index: {}]
  %s9 = inlined_call_operand.vmem [shape: f32[64,4], index: 9, kind: output, shape index: {}]
  %s10 = sld [smem:[#allocation0]]
  $region89: #{tpu_custom_call.1} parent=0
    _
  %s12 = ssub.s32 1, %s10
  %s13 = scalar_select 0, %s12, %s10
  $region1: #{tpu_custom_call.1} parent=0
    #allocation2 [shape = 'u8[16384]{0}', space=vmem, size = 0x4000, scoped, tag = 'input window, operand 0']
    #allocation3 [shape = 's32[2]{0}', space=sflag, size = 0x8, scoped, tag = 'scoped memory for tpu_custom_call.1']
    #allocation4 [shape = 'u8[24576]{0}', space=vmem, size = 0x6000, scoped, tag = 'input window, operand 1, single buffered']
    #allocation5 [shape = 's32[1]{0}', space=sflag, size = 0x4, scoped, tag = 'scoped memory for tpu_custom_call.1']
    #allocation6 [shape = 'u8[32768]{0}', space=vmem, size = 0x8000, scoped, tag = 'input window, operand 3, single buffered']
    #allocation7 [shape = 'u8[32768]{0}', space=vmem, size = 0x8000, scoped, tag = 'input window, operand 5, single buffered']
    #allocation8 [shape = 's32[1]{0}', space=sflag, size = 0x4, scoped, tag = 'scoped memory for tpu_custom_call.1']
    #allocation9 [shape = 'u8[32768]{0}', space=vmem, size = 0x8000, scoped, tag = 'input window, operand 7, single buffered']
    %14 = vsyncpa [#allocation3], 0
    %s15 = scalar_lea.sflag [#allocation3], 1
    %16 = vsyncpa %s15, 0
    %17 = vsyncpa [#allocation5], 0
    %18 = vsyncpa [#allocation8], 0
    loop: start=0, step=1, limit=4
    $region2: #{tpu_custom_call.1} parent=1 // loop_pre_header
      _
    $region3: #{tpu_custom_call.1} parent=1 // loop_header
      %s20 = sphi 0, %s24
      %p21 = scmp.ge.s32.totalorder %s20, 4
      %s30 = sphi 0, %s32
      %s33 = sphi 0, %s30
      %s34 = sphi 0, %s33
      %s50 = sphi 0, %s34
      %s54 = sphi 0, %s54
      %s56 = sphi 0, %s54
      %s57 = sphi 0, %s56
      %s71 = sphi 0, %s57
      %s75 = sphi 0, %s75
      %s77 = sphi 0, %s75
      %s78 = sphi 0, %s77
      %s92 = sphi 0, %s78
      %s96 = sphi 0, %s96
      %s98 = sphi 0, %s96
      %s99 = sphi 0, %s98
      %s113 = sphi 0, %s99
      %s117 = sphi 0, %s117
      %s119 = sphi 0, %s117
      %s120 = sphi 0, %s119
      %s134 = sphi 0, %s120
      %s138 = sphi 0, %s138
      %s140 = sphi 0, %s138
      %s141 = sphi 0, %s140
      %s155 = sphi 0, %s141
      %s159 = sphi 0, %s159
      %s161 = sphi 0, %s159
      %s162 = sphi 0, %s161
      %s176 = sphi 0, %s162
      %s180 = sphi 0, %s180
      %s182 = sphi 0, %s180
      %s183 = sphi 0, %s182
      %s197 = sphi 0, %s183
      %s201 = sphi 0, %s201
      %s203 = sphi 0, %s201
      %s204 = sphi 0, %s203
      %s218 = sphi 0, %s204
      %s224 = sphi 0, %s226
      %s227 = sphi 0, %s224
      %s228 = sphi 0, %s227
      %s244 = sphi 0, %s228
    $region4: #{tpu_custom_call.1} parent=1 // loop_header_branch
      %23 = sbr.rel (%p21) target = $region8
    $region5: #{tpu_custom_call.1} parent=1 // loop_body
      %s25 = ssub.s32 %s20, 1
      %s26 = ssub.s32 %s20, 2
      %s27 = sadd.s32 %s20, 1
      %s28 = ssub.s32 %s20, %s27
      %p29 = scmp.eq.s32.totalorder %s28, 0
      %s31 = sadd.s32 %s30, 1
      %s32 = scalar_select %p29, %s30, %s31
      %p35 = pneg %p29
      %p36 = scmp.eq.s32.totalorder %s20, 1
      %p37 = por %p35, %p36
      %p38 = scmp.ne.s32.totalorder %s30, %s33
      %p39 = scmp.eq.s32.totalorder %s20, 0
      %p40 = por %p38, %p39
      %p41 = scmp.ne.s32.totalorder %s30, %s33
      %p42 = scmp.eq.s32.totalorder %s25, 1
      %p43 = por %p41, %p42
      %p44 = scmp.ne.s32.totalorder %s33, %s34
      %p45 = scmp.eq.s32.totalorder %s25, 0
      %p46 = por %p44, %p45
      %p47 = scmp.ne.s32.totalorder %s33, %s34
      %p48 = scmp.eq.s32.totalorder %s26, 1
      %p49 = por %p47, %p48
      %p51 = scmp.ne.s32.totalorder %s34, %s50
      %p52 = scmp.eq.s32.totalorder %s26, 0
      %p53 = por %p51, %p52
      %s55 = sadd.s32 %s54, 1
      %p58 = scmp.eq.s32.totalorder %s20, 1
      %p59 = scmp.ne.s32.totalorder %s54, %s56
      %p60 = scmp.eq.s32.totalorder %s20, 0
      %p61 = por %p59, %p60
      %p62 = scmp.ne.s32.totalorder %s54, %s56
      %p63 = scmp.eq.s32.totalorder %s25, 1
      %p64 = por %p62, %p63
      %p65 = scmp.ne.s32.totalorder %s56, %s57
      %p66 = scmp.eq.s32.totalorder %s25, 0
      %p67 = por %p65, %p66
      %p68 = scmp.ne.s32.totalorder %s56, %s57
      %p69 = scmp.eq.s32.totalorder %s26, 1
      %p70 = por %p68, %p69
      %p72 = scmp.ne.s32.totalorder %s57, %s71
      %p73 = scmp.eq.s32.totalorder %s26, 0
      %p74 = por %p72, %p73
      %s76 = sadd.s32 %s75, 1
      %p79 = scmp.eq.s32.totalorder %s20, 1
      %p80 = scmp.ne.s32.totalorder %s75, %s77
      %p81 = scmp.eq.s32.totalorder %s20, 0
      %p82 = por %p80, %p81
      %p83 = scmp.ne.s32.totalorder %s75, %s77
      %p84 = scmp.eq.s32.totalorder %s25, 1
      %p85 = por %p83, %p84
      %p86 = scmp.ne.s32.totalorder %s77, %s78
      %p87 = scmp.eq.s32.totalorder %s25, 0
      %p88 = por %p86, %p87
      %p89 = scmp.ne.s32.totalorder %s77, %s78
      %p90 = scmp.eq.s32.totalorder %s26, 1
      %p91 = por %p89, %p90
      %p93 = scmp.ne.s32.totalorder %s78, %s92
      %p94 = scmp.eq.s32.totalorder %s26, 0
      %p95 = por %p93, %p94
      %s97 = sadd.s32 %s96, 1
      %p100 = scmp.eq.s32.totalorder %s20, 1
      %p101 = scmp.ne.s32.totalorder %s96, %s98
      %p102 = scmp.eq.s32.totalorder %s20, 0
      %p103 = por %p101, %p102
      %p104 = scmp.ne.s32.totalorder %s96, %s98
      %p105 = scmp.eq.s32.totalorder %s25, 1
      %p106 = por %p104, %p105
      %p107 = scmp.ne.s32.totalorder %s98, %s99
      %p108 = scmp.eq.s32.totalorder %s25, 0
      %p109 = por %p107, %p108
      %p110 = scmp.ne.s32.totalorder %s98, %s99
      %p111 = scmp.eq.s32.totalorder %s26, 1
      %p112 = por %p110, %p111
      %p114 = scmp.ne.s32.totalorder %s99, %s113
      %p115 = scmp.eq.s32.totalorder %s26, 0
      %p116 = por %p114, %p115
      %s118 = sadd.s32 %s117, 1
      %p121 = scmp.eq.s32.totalorder %s20, 1
      %p122 = scmp.ne.s32.totalorder %s117, %s119
      %p123 = scmp.eq.s32.totalorder %s20, 0
      %p124 = por %p122, %p123
      %p125 = scmp.ne.s32.totalorder %s117, %s119
      %p126 = scmp.eq.s32.totalorder %s25, 1
      %p127 = por %p125, %p126
      %p128 = scmp.ne.s32.totalorder %s119, %s120
      %p129 = scmp.eq.s32.totalorder %s25, 0
      %p130 = por %p128, %p129
      %p131 = scmp.ne.s32.totalorder %s119, %s120
      %p132 = scmp.eq.s32.totalorder %s26, 1
      %p133 = por %p131, %p132
      %p135 = scmp.ne.s32.totalorder %s120, %s134
      %p136 = scmp.eq.s32.totalorder %s26, 0
      %p137 = por %p135, %p136
      %s139 = sadd.s32 %s138, 1
      %p142 = scmp.eq.s32.totalorder %s20, 1
      %p143 = scmp.ne.s32.totalorder %s138, %s140
      %p144 = scmp.eq.s32.totalorder %s20, 0
      %p145 = por %p143, %p144
      %p146 = scmp.ne.s32.totalorder %s138, %s140
      %p147 = scmp.eq.s32.totalorder %s25, 1
      %p148 = por %p146, %p147
      %p149 = scmp.ne.s32.totalorder %s140, %s141
      %p150 = scmp.eq.s32.totalorder %s25, 0
      %p151 = por %p149, %p150
      %p152 = scmp.ne.s32.totalorder %s140, %s141
      %p153 = scmp.eq.s32.totalorder %s26, 1
      %p154 = por %p152, %p153
      %p156 = scmp.ne.s32.totalorder %s141, %s155
      %p157 = scmp.eq.s32.totalorder %s26, 0
      %p158 = por %p156, %p157
      %s160 = sadd.s32 %s159, 1
      %p163 = scmp.eq.s32.totalorder %s20, 1
      %p164 = scmp.ne.s32.totalorder %s159, %s161
      %p165 = scmp.eq.s32.totalorder %s20, 0
      %p166 = por %p164, %p165
      %p167 = scmp.ne.s32.totalorder %s159, %s161
      %p168 = scmp.eq.s32.totalorder %s25, 1
      %p169 = por %p167, %p168
      %p170 = scmp.ne.s32.totalorder %s161, %s162
      %p171 = scmp.eq.s32.totalorder %s25, 0
      %p172 = por %p170, %p171
      %p173 = scmp.ne.s32.totalorder %s161, %s162
      %p174 = scmp.eq.s32.totalorder %s26, 1
      %p175 = por %p173, %p174
      %p177 = scmp.ne.s32.totalorder %s162, %s176
      %p178 = scmp.eq.s32.totalorder %s26, 0
      %p179 = por %p177, %p178
      %s181 = sadd.s32 %s180, 1
      %p184 = scmp.eq.s32.totalorder %s20, 1
      %p185 = scmp.ne.s32.totalorder %s180, %s182
      %p186 = scmp.eq.s32.totalorder %s20, 0
      %p187 = por %p185, %p186
      %p188 = scmp.ne.s32.totalorder %s180, %s182
      %p189 = scmp.eq.s32.totalorder %s25, 1
      %p190 = por %p188, %p189
      %p191 = scmp.ne.s32.totalorder %s182, %s183
      %p192 = scmp.eq.s32.totalorder %s25, 0
      %p193 = por %p191, %p192
      %p194 = scmp.ne.s32.totalorder %s182, %s183
      %p195 = scmp.eq.s32.totalorder %s26, 1
      %p196 = por %p194, %p195
      %p198 = scmp.ne.s32.totalorder %s183, %s197
      %p199 = scmp.eq.s32.totalorder %s26, 0
      %p200 = por %p198, %p199
      %s202 = sadd.s32 %s201, 1
      %p205 = scmp.eq.s32.totalorder %s20, 1
      %p206 = scmp.ne.s32.totalorder %s201, %s203
      %p207 = scmp.eq.s32.totalorder %s20, 0
      %p208 = por %p206, %p207
      %p209 = scmp.ne.s32.totalorder %s201, %s203
      %p210 = scmp.eq.s32.totalorder %s25, 1
      %p211 = por %p209, %p210
      %p212 = scmp.ne.s32.totalorder %s203, %s204
      %p213 = scmp.eq.s32.totalorder %s25, 0
      %p214 = por %p212, %p213
      %p215 = scmp.ne.s32.totalorder %s203, %s204
      %p216 = scmp.eq.s32.totalorder %s26, 1
      %p217 = por %p215, %p216
      %p219 = scmp.ne.s32.totalorder %s204, %s218
      %p220 = scmp.eq.s32.totalorder %s26, 0
      %p221 = por %p219, %p220
      %s222 = ssub.s32 %s20, %s27
      %p223 = scmp.eq.s32.totalorder %s222, 0
      %s225 = sadd.s32 %s224, 1
      %s226 = scalar_select %p223, %s224, %s225
      %p229 = pneg %p223
      %p230 = scmp.eq.s32.totalorder %s20, 1
      %p231 = por %p229, %p230
      %p232 = scmp.ne.s32.totalorder %s224, %s227
      %p233 = scmp.eq.s32.totalorder %s20, 0
      %p234 = por %p232, %p233
      %p235 = scmp.ne.s32.totalorder %s224, %s227
      %p236 = scmp.eq.s32.totalorder %s25, 1
      %p237 = por %p235, %p236
      %p238 = scmp.ne.s32.totalorder %s227, %s228
      %p239 = scmp.eq.s32.totalorder %s25, 0
      %p240 = por %p238, %p239
      %p241 = scmp.ne.s32.totalorder %s227, %s228
      %p242 = scmp.eq.s32.totalorder %s26, 1
      %p243 = por %p241, %p242
      %p245 = scmp.ne.s32.totalorder %s228, %s244
      %p246 = scmp.eq.s32.totalorder %s26, 0
      %p247 = por %p245, %p246
      %p248 = scmp.le.s32.totalorder 1, %s20
      %p249 = scmp.lt.s32.totalorder %s20, 3
      %p250 = pnand %p248, %p249
      %p251 = pneg %p250
      // Predicated region
      $region9: #{tpu_custom_call.1} parent=5 // pred_check
        _
      $region10: #{tpu_custom_call.1} parent=5 // pred_check_branch
        %253 = sbr.rel (%p250) target = $region12
      $region11: #{tpu_custom_call.1} parent=5 // pred_region
        %s254 = ssub.s32 %s20, 1
        // Predicated region
        $region13: #{tpu_custom_call.1} parent=11 // pred_check
          %p255 = pneg %p67
        $region14: #{tpu_custom_call.1} parent=11 // pred_check_branch
          %257 = sbr.rel (%p255) target = $region16
        $region15: #{tpu_custom_call.1} parent=11 // pred_region
          %s259 = ssub.s32 768, 768
          %260 = vsyncadd [#allocation5], %s259
          %s261 = sshll.u32 [#allocation4], 4
          %s262 = int_to_ptr.vmem [resolvable:$true] %s261
          %267 = dma.hbm_to_vmem [thread:$0]  %s1, 768, %s262, [#allocation5], 64, 64, 4
        $region16: #{tpu_custom_call.1} parent=11 // pred_fallthru
          _
        // Predicated region
        $region17: #{tpu_custom_call.1} parent=11 // pred_check
          %p268 = pneg %p88
        $region18: #{tpu_custom_call.1} parent=11 // pred_check_branch
          %270 = sbr.rel (%p268) target = $region20
        $region19: #{tpu_custom_call.1} parent=11 // pred_region
          _
        $region20: #{tpu_custom_call.1} parent=11 // pred_fallthru
          _
        // Predicated region
        $region21: #{tpu_custom_call.1} parent=11 // pred_check
          %p271 = pneg %p109
        $region22: #{tpu_custom_call.1} parent=11 // pred_check_branch
          %273 = sbr.rel (%p271) target = $region24
        $region23: #{tpu_custom_call.1} parent=11 // pred_region
          %s275 = ssub.s32 1024, 1024
          %276 = vsyncadd [#allocation5], %s275
          %s277 = sshll.u32 [#allocation6], 4
          %s278 = int_to_ptr.vmem [resolvable:$true] %s277
          %283 = dma.hbm_to_vmem [thread:$0]  %s3, 1024, %s278, [#allocation5], 64, 64, 4
        $region24: #{tpu_custom_call.1} parent=11 // pred_fallthru
          _
        // Predicated region
        $region25: #{tpu_custom_call.1} parent=11 // pred_check
          %p284 = pneg %p130
        $region26: #{tpu_custom_call.1} parent=11 // pred_check_branch
          %286 = sbr.rel (%p284) target = $region28
        $region27: #{tpu_custom_call.1} parent=11 // pred_region
          _
        $region28: #{tpu_custom_call.1} parent=11 // pred_fallthru
          _
        // Predicated region
        $region29: #{tpu_custom_call.1} parent=11 // pred_check
          %p287 = pneg %p151
        $region30: #{tpu_custom_call.1} parent=11 // pred_check_branch
          %289 = sbr.rel (%p287) target = $region32
        $region31: #{tpu_custom_call.1} parent=11 // pred_region
          %s291 = ssub.s32 1024, 1024
          %292 = vsyncadd [#allocation8], %s291
          %s293 = sshll.u32 [#allocation7], 4
          %s294 = int_to_ptr.vmem [resolvable:$true] %s293
          %299 = dma.hbm_to_vmem [thread:$0]  %s5, 1024, %s294, [#allocation8], 64, 64, 4
        $region32: #{tpu_custom_call.1} parent=11 // pred_fallthru
          _
        // Predicated region
        $region33: #{tpu_custom_call.1} parent=11 // pred_check
          %p300 = pneg %p172
        $region34: #{tpu_custom_call.1} parent=11 // pred_check_branch
          %302 = sbr.rel (%p300) target = $region36
        $region35: #{tpu_custom_call.1} parent=11 // pred_region
          _
        $region36: #{tpu_custom_call.1} parent=11 // pred_fallthru
          _
        // Predicated region
        $region37: #{tpu_custom_call.1} parent=11 // pred_check
          %p303 = pneg %p193
        $region38: #{tpu_custom_call.1} parent=11 // pred_check_branch
          %305 = sbr.rel (%p303) target = $region40
        $region39: #{tpu_custom_call.1} parent=11 // pred_region
          %s307 = ssub.s32 1024, 1024
          %308 = vsyncadd [#allocation8], %s307
          %s309 = sshll.u32 [#allocation9], 4
          %s310 = int_to_ptr.vmem [resolvable:$true] %s309
          %315 = dma.hbm_to_vmem [thread:$0]  %s7, 1024, %s310, [#allocation8], 64, 64, 4
        $region40: #{tpu_custom_call.1} parent=11 // pred_fallthru
          _
        // Predicated region
        $region41: #{tpu_custom_call.1} parent=11 // pred_check
          %p316 = pneg %p214
        $region42: #{tpu_custom_call.1} parent=11 // pred_check_branch
          %318 = sbr.rel (%p316) target = $region44
        $region43: #{tpu_custom_call.1} parent=11 // pred_region
          _
        $region44: #{tpu_custom_call.1} parent=11 // pred_fallthru
          _
      $region12: #{tpu_custom_call.1} parent=5 // pred_fallthru
        _
      %p319 = scmp.lt.s32.totalorder %s20, 2
      // Predicated region
      $region45: #{tpu_custom_call.1} parent=5 // pred_check
        %p320 = pneg %p319
      $region46: #{tpu_custom_call.1} parent=5 // pred_check_branch
        %322 = sbr.rel (%p320) target = $region48
      $region47: #{tpu_custom_call.1} parent=5 // pred_region
        // Predicated region
        $region49: #{tpu_custom_call.1} parent=47 // pred_check
          %p323 = pneg %p40
        $region50: #{tpu_custom_call.1} parent=47 // pred_check_branch
          %325 = sbr.rel (%p323) target = $region52
        $region51: #{tpu_custom_call.1} parent=47 // pred_region
          %s326 = sand.u32 %s30, 1
          %s327 = scalar_lea.sflag [#allocation3], %s326
          %s328 = sand.u32 %s30, 1
          %s329 = smul.addr %s328, 16
          %s330 = scalar_lea.vmem [#allocation2], %s329
          %s331 = smul.u32 4, %s20
          %s333 = ssub.s32 256, 256
          %334 = vsyncadd %s327, %s333
          %s335 = smul.addr %s331, 64
          %s336 = scalar_lea.hbm %s0, %s335
          %s337 = sshll.u32 %s330, 4
          %s338 = int_to_ptr.vmem [resolvable:$true] %s337
          %343 = dma.hbm_to_vmem [thread:$0]  %s336, 256, %s338, %s327, 64, 64, 4
        $region52: #{tpu_custom_call.1} parent=47 // pred_fallthru
          _
      $region48: #{tpu_custom_call.1} parent=5 // pred_fallthru
        _
      %p344 = scmp.le.s32.totalorder 1, %s20
      %p345 = scmp.lt.s32.totalorder %s20, 3
      %p346 = pnand %p344, %p345
      %p347 = pneg %p346
      // Predicated region
      $region53: #{tpu_custom_call.1} parent=5 // pred_check
        _
      $region54: #{tpu_custom_call.1} parent=5 // pred_check_branch
        %349 = sbr.rel (%p346) target = $region56
      $region55: #{tpu_custom_call.1} parent=5 // pred_region
        %s350 = ssub.s32 %s20, 1
        %s351 = sand.u32 %s33, 1
        %s352 = scalar_lea.sflag [#allocation3], %s351
        %s353 = sand.u32 %s33, 1
        %s354 = smul.addr %s353, 16
        %s355 = scalar_lea.vmem [#allocation2], %s354
        // Predicated region
        $region57: #{tpu_custom_call.1} parent=55 // pred_check
          %p356 = pneg %p46
        $region58: #{tpu_custom_call.1} parent=55 // pred_check_branch
          %358 = sbr.rel (%p356) target = $region60
        $region59: #{tpu_custom_call.1} parent=55 // pred_region
          %359 = dma.done %s352, 256
        $region60: #{tpu_custom_call.1} parent=55 // pred_fallthru
          _
        // Predicated region
        $region61: #{tpu_custom_call.1} parent=55 // pred_check
          %p360 = pneg %p67
        $region62: #{tpu_custom_call.1} parent=55 // pred_check_branch
          %362 = sbr.rel (%p360) target = $region64
        $region63: #{tpu_custom_call.1} parent=55 // pred_region
          %363 = dma.done [#allocation5], 768
        $region64: #{tpu_custom_call.1} parent=55 // pred_fallthru
          _
        // Predicated region
        $region65: #{tpu_custom_call.1} parent=55 // pred_check
          %p364 = pneg %p109
        $region66: #{tpu_custom_call.1} parent=55 // pred_check_branch
          %366 = sbr.rel (%p364) target = $region68
        $region67: #{tpu_custom_call.1} parent=55 // pred_region
          %367 = dma.done [#allocation5], 1024
        $region68: #{tpu_custom_call.1} parent=55 // pred_fallthru
          _
        // Predicated region
        $region69: #{tpu_custom_call.1} parent=55 // pred_check
          %p368 = pneg %p151
        $region70: #{tpu_custom_call.1} parent=55 // pred_check_branch
          %370 = sbr.rel (%p368) target = $region72
        $region71: #{tpu_custom_call.1} parent=55 // pred_region
          %371 = dma.done [#allocation8], 1024
        $region72: #{tpu_custom_call.1} parent=55 // pred_fallthru
          _
        // Predicated region
        $region73: #{tpu_custom_call.1} parent=55 // pred_check
          %p372 = pneg %p193
        $region74: #{tpu_custom_call.1} parent=55 // pred_check_branch
          %374 = sbr.rel (%p372) target = $region76
        $region75: #{tpu_custom_call.1} parent=55 // pred_region
          %375 = dma.done [#allocation8], 1024
        $region76: #{tpu_custom_call.1} parent=55 // pred_fallthru
          _
        %s376 = sand.u32 %s33, 1
        %s377 = scalar_lea.sflag [#allocation3], %s376
        %s378 = sand.u32 %s33, 1
        %s379 = smul.addr %s378, 16
        %s380 = scalar_lea.vmem [#allocation2], %s379
        %p381 = pneg %p46
        %p382 = pneg %p43
        %p383 = pneg %p67
        %p384 = pneg %p64
        %p385 = pneg %p88
        %p386 = pneg %p85
        %p387 = pneg %p109
        %p388 = pneg %p106
        %p389 = pneg %p130
        %p390 = pneg %p127
        %p391 = pneg %p151
        %p392 = pneg %p148
        %p393 = pneg %p172
        %p394 = pneg %p169
        %p395 = pneg %p193
        %p396 = pneg %p190
        %p397 = pneg %p214
        %p398 = pneg %p211
        %p399 = pneg %p240
        %p400 = pneg %p237
        %s401 = smul.u32 4, %s25
        %p402 = scmp.lt.s32.totalorder %s401, 7
        %s403 = scalar_select %p402, %s401, 7
        %s404 = smul.addr %s403, 8
        %s405 = scalar_lea.vmem %s9, %s404
        %s406 = smul.u32 4, %s25
        %s407 = smul.u32 4, %s25
        %p408 = scmp.lt.s32.totalorder %s407, 7
        %s409 = scalar_select %p408, %s407, 7
        %s410 = smul.addr %s409, 8
        %s411 = scalar_lea.vmem %s9, %s410
        %s412 = smul.u32 4, %s25
        %v414 = vld [vmem:[%s355] sm:$0xf]
        %v415 = vld [vmem:[%s355 + $0x4] sm:$0xf]
        %v416 = vld [vmem:[%s355 + $0x8] sm:$0xf]
        %v417 = vld [vmem:[%s355 + $0xc] sm:$0xf]
        %v418 = vld [vmem:[#allocation4] sm:$0xf]
        %v419 = vld [vmem:[#allocation4 + $0x4] sm:$0xf]
        %v420 = vld [vmem:[#allocation4 + $0x8] sm:$0xf]
        %v421 = vld [vmem:[#allocation4 + $0xc] sm:$0xf]
        %v422 = vld [vmem:[#allocation4 + $0x10] sm:$0xf]
        %v423 = vld [vmem:[#allocation4 + $0x14] sm:$0xf]
        %v424 = vld [vmem:[#allocation4 + $0x18] sm:$0xf]
        %v425 = vld [vmem:[#allocation4 + $0x1c] sm:$0xf]
        %v426 = vld [vmem:[#allocation4 + $0x20] sm:$0xf]
        %v427 = vld [vmem:[#allocation4 + $0x24] sm:$0xf]
        %v428 = vld [vmem:[#allocation4 + $0x28] sm:$0xf]
        %v429 = vld [vmem:[#allocation4 + $0x2c] sm:$0xf]
        %v430 = vld [vmem:[%s2] sm:$0x1]
        %v432 = vlaneseq
        %v433 = vshrl.u32 %v432, 7
        %v434 = vsub.s32 0, %v433
        %v435 = vrot.slane %v430, %v434
        %v441 = vunpack.c.l.b16 %v414
        %v442 = vunpack.c.l.b16 %v415
        %v443 = vunpack.c.l.b16 %v416
        %v444 = vunpack.c.l.b16 %v417
        %v445 = vpack.c.b16 %v442, %v441
        %v446 = vpack.c.b16 %v444, %v443
        %v459 = vunpack.c.l.b16 %v418
        %v460 = vunpack.c.l.b16 %v419
        %v461 = vunpack.c.l.b16 %v420
        %v462 = vunpack.c.l.b16 %v421
        %v463 = vunpack.c.l.b16 %v422
        %v464 = vunpack.c.l.b16 %v423
        %v465 = vunpack.c.l.b16 %v424
        %v466 = vunpack.c.l.b16 %v425
        %v467 = vunpack.c.l.b16 %v426
        %v468 = vunpack.c.l.b16 %v427
        %v469 = vunpack.c.l.b16 %v428
        %v470 = vunpack.c.l.b16 %v429
        %v471 = vpack.c.b16 %v460, %v459
        %v472 = vpack.c.b16 %v462, %v461
        %v473 = vpack.c.b16 %v464, %v463
        %v474 = vpack.c.b16 %v466, %v465
        %v475 = vpack.c.b16 %v468, %v467
        %v476 = vpack.c.b16 %v470, %v469
        %vm483 = vcmask 785408
        %v485 = vsel %vm483, %v445, 0
        %v488 = vsel %vm483, %v446, 0
        %490 = vmatprep.subr.bf16.mxu0 0
        %491 = vmatpush1.bf16.msra.mxu0 %v471
        %492 = vmatprep.subr.bf16.mxu0 0
        %493 = vmatpush1.bf16.msra.mxu0 %v472
        %494 = vmatprep.subr.bf16.mxu0 0
        %495 = vmatpush1.bf16.msra.mxu0 %v473
        %496 = vmatprep.subr.bf16.mxu0 0
        %497 = vmatpush1.bf16.msra.mxu0 %v474
        %498 = vmatprep.subr.bf16.mxu0 0
        %499 = vmatpush1.bf16.msra.mxu0 %v475
        %500 = vmatprep.subr.bf16.mxu0 0
        %501 = vmatpush1.bf16.msra.mxu0 %v476
        %502 = vmatprep.subr.bf16.mxu0 0
        %503 = vmatpush1.bf16.msra.mxu0 0
        %504 = vmatprep.subr.bf16.mxu0 0
        %505 = vmatpush1.bf16.msra.mxu0 0
        %506 = vmatprep.subr.bf16.mxu0 0
        %507 = vmatpush1.bf16.msra.mxu0 0
        %508 = vmatprep.subr.bf16.mxu0 0
        %509 = vmatpush1.bf16.msra.mxu0 0
        %510 = vmatprep.subr.bf16.mxu0 0
        %511 = vmatpush1.bf16.msra.mxu0 0
        %512 = vmatprep.subr.bf16.mxu0 0
        %513 = vmatpush1.bf16.msra.mxu0 0
        %514 = vmatprep.subr.bf16.mxu0 0
        %515 = vmatpush1.bf16.msra.mxu0 0
        %516 = vmatprep.subr.bf16.mxu0 0
        %517 = vmatpush1.bf16.msra.mxu0 0
        %518 = vmatprep.subr.bf16.mxu0 0
        %519 = vmatpush1.bf16.msra.mxu0 0
        %520 = vmatprep.subr.bf16.mxu0 0
        %521 = vmatpush1.bf16.msra.mxu0 0
        %522 = vmatprep.mubr.bf16.mxu0 0
        %523 = vmatmul.mubr.bf16.gmra.mrb[0].mxu0 %v485
        %v524 = vpop.f32.mrb[0].mxu0
        %v525 = vadd.f32 %v435, %v524
        %v526 = vpop.f32.mrb[0].mxu0
        %v527 = vpop.f32.mrb[0].mxu0
        %v528 = vadd.f32 %v435, %v527
        %v529 = vpop.f32.mrb[0].mxu0
        %530 = vmatprep.mubr.bf16.mxu0 0
        %531 = vmatmul.mubr.bf16.gmra.mrb[0].mxu0 %v488
        %v532 = vpop.f32.mrb[0].mxu0
        %v533 = vadd.f32 %v435, %v532
        %v534 = vpop.f32.mrb[0].mxu0
        %v535 = vpop.f32.mrb[0].mxu0
        %v536 = vadd.f32 %v435, %v535
        %v537 = vpop.f32.mrb[0].mxu0
        %538 = vdwg.mxu0
        %v539 = vmax.f32 %v525, 0.0
        %v540 = vmax.f32 %v528, 0.0
        %v541 = vmax.f32 %v533, 0.0
        %v542 = vmax.f32 %v536, 0.0
        %v543 = vpack.c.bf16 %v540, %v539
        %v544 = vpack.c.bf16 %v542, %v541
        %v545 = vld [vmem:[#allocation6] sm:$0xf]
        %v546 = vld [vmem:[#allocation6 + $0x4] sm:$0xf]
        %v547 = vld [vmem:[#allocation6 + $0x8] sm:$0xf]
        %v548 = vld [vmem:[#allocation6 + $0xc] sm:$0xf]
        %v549 = vld [vmem:[#allocation6 + $0x10] sm:$0xf]
        %v550 = vld [vmem:[#allocation6 + $0x14] sm:$0xf]
        %v551 = vld [vmem:[#allocation6 + $0x18] sm:$0xf]
        %v552 = vld [vmem:[#allocation6 + $0x1c] sm:$0xf]
        %v553 = vld [vmem:[#allocation6 + $0x20] sm:$0xf]
        %v554 = vld [vmem:[#allocation6 + $0x24] sm:$0xf]
        %v555 = vld [vmem:[#allocation6 + $0x28] sm:$0xf]
        %v556 = vld [vmem:[#allocation6 + $0x2c] sm:$0xf]
        %v557 = vld [vmem:[#allocation6 + $0x30] sm:$0xf]
        %v558 = vld [vmem:[#allocation6 + $0x34] sm:$0xf]
        %v559 = vld [vmem:[#allocation6 + $0x38] sm:$0xf]
        %v560 = vld [vmem:[#allocation6 + $0x3c] sm:$0xf]
        %v561 = vld [vmem:[%s4] sm:$0x1]
        %v563 = vlaneseq
        %v564 = vshrl.u32 %v563, 7
        %v565 = vsub.s32 0, %v564
        %v566 = vrot.slane %v561, %v565
        %v584 = vunpack.c.l.b16 %v545
        %v585 = vunpack.c.l.b16 %v546
        %v586 = vunpack.c.l.b16 %v547
        %v587 = vunpack.c.l.b16 %v548
        %v588 = vunpack.c.l.b16 %v549
        %v589 = vunpack.c.l.b16 %v550
        %v590 = vunpack.c.l.b16 %v551
        %v591 = vunpack.c.l.b16 %v552
        %v592 = vunpack.c.l.b16 %v553
        %v593 = vunpack.c.l.b16 %v554
        %v594 = vunpack.c.l.b16 %v555
        %v595 = vunpack.c.l.b16 %v556
        %v596 = vunpack.c.l.b16 %v557
        %v597 = vunpack.c.l.b16 %v558
        %v598 = vunpack.c.l.b16 %v559
        %v599 = vunpack.c.l.b16 %v560
        %v600 = vpack.c.b16 %v585, %v584
        %v601 = vpack.c.b16 %v587, %v586
        %v602 = vpack.c.b16 %v589, %v588
        %v603 = vpack.c.b16 %v591, %v590
        %v604 = vpack.c.b16 %v593, %v592
        %v605 = vpack.c.b16 %v595, %v594
        %v606 = vpack.c.b16 %v597, %v596
        %v607 = vpack.c.b16 %v599, %v598
        %616 = vmatprep.subr.bf16.mxu0 0
        %617 = vmatpush1.bf16.msra.mxu0 %v600
        %618 = vmatprep.subr.bf16.mxu0 0
        %619 = vmatpush1.bf16.msra.mxu0 %v601
        %620 = vmatprep.subr.bf16.mxu0 0
        %621 = vmatpush1.bf16.msra.mxu0 %v602
        %622 = vmatprep.subr.bf16.mxu0 0
        %623 = vmatpush1.bf16.msra.mxu0 %v603
        %624 = vmatprep.subr.bf16.mxu0 0
        %625 = vmatpush1.bf16.msra.mxu0 %v604
        %626 = vmatprep.subr.bf16.mxu0 0
        %627 = vmatpush1.bf16.msra.mxu0 %v605
        %628 = vmatprep.subr.bf16.mxu0 0
        %629 = vmatpush1.bf16.msra.mxu0 %v606
        %630 = vmatprep.subr.bf16.mxu0 0
        %631 = vmatpush1.bf16.msra.mxu0 %v607
        %632 = vmatprep.subr.bf16.mxu0 0
        %633 = vmatpush1.bf16.msra.mxu0 0
        %634 = vmatprep.subr.bf16.mxu0 0
        %635 = vmatpush1.bf16.msra.mxu0 0
        %636 = vmatprep.subr.bf16.mxu0 0
        %637 = vmatpush1.bf16.msra.mxu0 0
        %638 = vmatprep.subr.bf16.mxu0 0
        %639 = vmatpush1.bf16.msra.mxu0 0
        %640 = vmatprep.subr.bf16.mxu0 0
        %641 = vmatpush1.bf16.msra.mxu0 0
        %642 = vmatprep.subr.bf16.mxu0 0
        %643 = vmatpush1.bf16.msra.mxu0 0
        %644 = vmatprep.subr.bf16.mxu0 0
        %645 = vmatpush1.bf16.msra.mxu0 0
        %646 = vmatprep.subr.bf16.mxu0 0
        %647 = vmatpush1.bf16.msra.mxu0 0
        %648 = vmatprep.mubr.bf16.mxu0 0
        %649 = vmatmul.mubr.bf16.gmra.mrb[0].mxu0 %v543
        %v650 = vpop.f32.mrb[0].mxu0
        %v651 = vadd.f32 %v566, %v650
        %v652 = vpop.f32.mrb[0].mxu0
        %v653 = vpop.f32.mrb[0].mxu0
        %v654 = vadd.f32 %v566, %v653
        %v655 = vpop.f32.mrb[0].mxu0
        %656 = vmatprep.mubr.bf16.mxu0 0
        %657 = vmatmul.mubr.bf16.gmra.mrb[0].mxu0 %v544
        %v658 = vpop.f32.mrb[0].mxu0
        %v659 = vadd.f32 %v566, %v658
        %v660 = vpop.f32.mrb[0].mxu0
        %v661 = vpop.f32.mrb[0].mxu0
        %v662 = vadd.f32 %v566, %v661
        %v663 = vpop.f32.mrb[0].mxu0
        %664 = vdwg.mxu0
        %v665 = vmax.f32 %v651, 0.0
        %v666 = vmax.f32 %v654, 0.0
        %v667 = vmax.f32 %v659, 0.0
        %v668 = vmax.f32 %v662, 0.0
        %v669 = vpack.c.bf16 %v666, %v665
        %v670 = vpack.c.bf16 %v668, %v667
        %v671 = vld [vmem:[#allocation7] sm:$0xf]
        %v672 = vld [vmem:[#allocation7 + $0x4] sm:$0xf]
        %v673 = vld [vmem:[#allocation7 + $0x8] sm:$0xf]
        %v674 = vld [vmem:[#allocation7 + $0xc] sm:$0xf]
        %v675 = vld [vmem:[#allocation7 + $0x10] sm:$0xf]
        %v676 = vld [vmem:[#allocation7 + $0x14] sm:$0xf]
        %v677 = vld [vmem:[#allocation7 + $0x18] sm:$0xf]
        %v678 = vld [vmem:[#allocation7 + $0x1c] sm:$0xf]
        %v679 = vld [vmem:[#allocation7 + $0x20] sm:$0xf]
        %v680 = vld [vmem:[#allocation7 + $0x24] sm:$0xf]
        %v681 = vld [vmem:[#allocation7 + $0x28] sm:$0xf]
        %v682 = vld [vmem:[#allocation7 + $0x2c] sm:$0xf]
        %v683 = vld [vmem:[#allocation7 + $0x30] sm:$0xf]
        %v684 = vld [vmem:[#allocation7 + $0x34] sm:$0xf]
        %v685 = vld [vmem:[#allocation7 + $0x38] sm:$0xf]
        %v686 = vld [vmem:[#allocation7 + $0x3c] sm:$0xf]
        %v687 = vld [vmem:[%s6] sm:$0x1]
        %v689 = vlaneseq
        %v690 = vshrl.u32 %v689, 7
        %v691 = vsub.s32 0, %v690
        %v692 = vrot.slane %v687, %v691
        %v710 = vunpack.c.l.b16 %v671
        %v711 = vunpack.c.l.b16 %v672
        %v712 = vunpack.c.l.b16 %v673
        %v713 = vunpack.c.l.b16 %v674
        %v714 = vunpack.c.l.b16 %v675
        %v715 = vunpack.c.l.b16 %v676
        %v716 = vunpack.c.l.b16 %v677
        %v717 = vunpack.c.l.b16 %v678
        %v718 = vunpack.c.l.b16 %v679
        %v719 = vunpack.c.l.b16 %v680
        %v720 = vunpack.c.l.b16 %v681
        %v721 = vunpack.c.l.b16 %v682
        %v722 = vunpack.c.l.b16 %v683
        %v723 = vunpack.c.l.b16 %v684
        %v724 = vunpack.c.l.b16 %v685
        %v725 = vunpack.c.l.b16 %v686
        %v726 = vpack.c.b16 %v711, %v710
        %v727 = vpack.c.b16 %v713, %v712
        %v728 = vpack.c.b16 %v715, %v714
        %v729 = vpack.c.b16 %v717, %v716
        %v730 = vpack.c.b16 %v719, %v718
        %v731 = vpack.c.b16 %v721, %v720
        %v732 = vpack.c.b16 %v723, %v722
        %v733 = vpack.c.b16 %v725, %v724
        %742 = vmatprep.subr.bf16.mxu0 0
        %743 = vmatpush1.bf16.msra.mxu0 %v726
        %744 = vmatprep.subr.bf16.mxu0 0
        %745 = vmatpush1.bf16.msra.mxu0 %v727
        %746 = vmatprep.subr.bf16.mxu0 0
        %747 = vmatpush1.bf16.msra.mxu0 %v728
        %748 = vmatprep.subr.bf16.mxu0 0
        %749 = vmatpush1.bf16.msra.mxu0 %v729
        %750 = vmatprep.subr.bf16.mxu0 0
        %751 = vmatpush1.bf16.msra.mxu0 %v730
        %752 = vmatprep.subr.bf16.mxu0 0
        %753 = vmatpush1.bf16.msra.mxu0 %v731
        %754 = vmatprep.subr.bf16.mxu0 0
        %755 = vmatpush1.bf16.msra.mxu0 %v732
        %756 = vmatprep.subr.bf16.mxu0 0
        %757 = vmatpush1.bf16.msra.mxu0 %v733
        %758 = vmatprep.subr.bf16.mxu0 0
        %759 = vmatpush1.bf16.msra.mxu0 0
        %760 = vmatprep.subr.bf16.mxu0 0
        %761 = vmatpush1.bf16.msra.mxu0 0
        %762 = vmatprep.subr.bf16.mxu0 0
        %763 = vmatpush1.bf16.msra.mxu0 0
        %764 = vmatprep.subr.bf16.mxu0 0
        %765 = vmatpush1.bf16.msra.mxu0 0
        %766 = vmatprep.subr.bf16.mxu0 0
        %767 = vmatpush1.bf16.msra.mxu0 0
        %768 = vmatprep.subr.bf16.mxu0 0
        %769 = vmatpush1.bf16.msra.mxu0 0
        %770 = vmatprep.subr.bf16.mxu0 0
        %771 = vmatpush1.bf16.msra.mxu0 0
        %772 = vmatprep.subr.bf16.mxu0 0
        %773 = vmatpush1.bf16.msra.mxu0 0
        %774 = vmatprep.mubr.bf16.mxu0 0
        %775 = vmatmul.mubr.bf16.gmra.mrb[0].mxu0 %v669
        %v776 = vpop.f32.mrb[0].mxu0
        %v777 = vadd.f32 %v692, %v776
        %v778 = vpop.f32.mrb[0].mxu0
        %v779 = vpop.f32.mrb[0].mxu0
        %v780 = vadd.f32 %v692, %v779
        %v781 = vpop.f32.mrb[0].mxu0
        %782 = vmatprep.mubr.bf16.mxu0 0
        %783 = vmatmul.mubr.bf16.gmra.mrb[0].mxu0 %v670
        %v784 = vpop.f32.mrb[0].mxu0
        %v785 = vadd.f32 %v692, %v784
        %v786 = vpop.f32.mrb[0].mxu0
        %v787 = vpop.f32.mrb[0].mxu0
        %v788 = vadd.f32 %v692, %v787
        %v789 = vpop.f32.mrb[0].mxu0
        %790 = vdwg.mxu0
        %v791 = vmax.f32 %v777, 0.0
        %v792 = vmax.f32 %v780, 0.0
        %v793 = vmax.f32 %v785, 0.0
        %v794 = vmax.f32 %v788, 0.0
        %v795 = vpack.c.bf16 %v792, %v791
        %v796 = vpack.c.bf16 %v794, %v793
        %v797 = vld [vmem:[#allocation9] sm:$0xf]
        %v798 = vld [vmem:[#allocation9 + $0x4] sm:$0xf]
        %v799 = vld [vmem:[#allocation9 + $0x8] sm:$0xf]
        %v800 = vld [vmem:[#allocation9 + $0xc] sm:$0xf]
        %v801 = vld [vmem:[#allocation9 + $0x10] sm:$0xf]
        %v802 = vld [vmem:[#allocation9 + $0x14] sm:$0xf]
        %v803 = vld [vmem:[#allocation9 + $0x18] sm:$0xf]
        %v804 = vld [vmem:[#allocation9 + $0x1c] sm:$0xf]
        %v805 = vld [vmem:[#allocation9 + $0x20] sm:$0xf]
        %v806 = vld [vmem:[#allocation9 + $0x24] sm:$0xf]
        %v807 = vld [vmem:[#allocation9 + $0x28] sm:$0xf]
        %v808 = vld [vmem:[#allocation9 + $0x2c] sm:$0xf]
        %v809 = vld [vmem:[#allocation9 + $0x30] sm:$0xf]
        %v810 = vld [vmem:[#allocation9 + $0x34] sm:$0xf]
        %v811 = vld [vmem:[#allocation9 + $0x38] sm:$0xf]
        %v812 = vld [vmem:[#allocation9 + $0x3c] sm:$0xf]
        %v813 = vld [vmem:[%s8] sm:$0x1]
        %v815 = vlaneseq
        %v816 = vshrl.u32 %v815, 7
        %v817 = vsub.s32 0, %v816
        %v818 = vrot.slane %v813, %v817
        %v836 = vunpack.c.l.b16 %v797
        %v837 = vunpack.c.l.b16 %v798
        %v838 = vunpack.c.l.b16 %v799
        %v839 = vunpack.c.l.b16 %v800
        %v840 = vunpack.c.l.b16 %v801
        %v841 = vunpack.c.l.b16 %v802
        %v842 = vunpack.c.l.b16 %v803
        %v843 = vunpack.c.l.b16 %v804
        %v844 = vunpack.c.l.b16 %v805
        %v845 = vunpack.c.l.b16 %v806
        %v846 = vunpack.c.l.b16 %v807
        %v847 = vunpack.c.l.b16 %v808
        %v848 = vunpack.c.l.b16 %v809
        %v849 = vunpack.c.l.b16 %v810
        %v850 = vunpack.c.l.b16 %v811
        %v851 = vunpack.c.l.b16 %v812
        %v852 = vpack.c.b16 %v837, %v836
        %v853 = vpack.c.b16 %v839, %v838
        %v854 = vpack.c.b16 %v841, %v840
        %v855 = vpack.c.b16 %v843, %v842
        %v856 = vpack.c.b16 %v845, %v844
        %v857 = vpack.c.b16 %v847, %v846
        %v858 = vpack.c.b16 %v849, %v848
        %v859 = vpack.c.b16 %v851, %v850
        %868 = vmatprep.subr.bf16.mxu0 0
        %869 = vmatpush1.bf16.msra.mxu0 %v852
        %870 = vmatprep.subr.bf16.mxu0 0
        %871 = vmatpush1.bf16.msra.mxu0 %v853
        %872 = vmatprep.subr.bf16.mxu0 0
        %873 = vmatpush1.bf16.msra.mxu0 %v854
        %874 = vmatprep.subr.bf16.mxu0 0
        %875 = vmatpush1.bf16.msra.mxu0 %v855
        %876 = vmatprep.subr.bf16.mxu0 0
        %877 = vmatpush1.bf16.msra.mxu0 %v856
        %878 = vmatprep.subr.bf16.mxu0 0
        %879 = vmatpush1.bf16.msra.mxu0 %v857
        %880 = vmatprep.subr.bf16.mxu0 0
        %881 = vmatpush1.bf16.msra.mxu0 %v858
        %882 = vmatprep.subr.bf16.mxu0 0
        %883 = vmatpush1.bf16.msra.mxu0 %v859
        %884 = vmatprep.subr.bf16.mxu0 0
        %885 = vmatpush1.bf16.msra.mxu0 0
        %886 = vmatprep.subr.bf16.mxu0 0
        %887 = vmatpush1.bf16.msra.mxu0 0
        %888 = vmatprep.subr.bf16.mxu0 0
        %889 = vmatpush1.bf16.msra.mxu0 0
        %890 = vmatprep.subr.bf16.mxu0 0
        %891 = vmatpush1.bf16.msra.mxu0 0
        %892 = vmatprep.subr.bf16.mxu0 0
        %893 = vmatpush1.bf16.msra.mxu0 0
        %894 = vmatprep.subr.bf16.mxu0 0
        %895 = vmatpush1.bf16.msra.mxu0 0
        %896 = vmatprep.subr.bf16.mxu0 0
        %897 = vmatpush1.bf16.msra.mxu0 0
        %898 = vmatprep.subr.bf16.mxu0 0
        %899 = vmatpush1.bf16.msra.mxu0 0
        %900 = vmatprep.mubr.bf16.mxu0 0
        %901 = vmatmul.mubr.bf16.gmra.mrb[0].mxu0 %v795
        %v902 = vpop.f32.mrb[0].mxu0
        %v903 = vadd.f32 %v818, %v902
        %v904 = vpop.f32.mrb[0].mxu0
        %v905 = vpop.f32.mrb[0].mxu0
        %v906 = vadd.f32 %v818, %v905
        %v907 = vpop.f32.mrb[0].mxu0
        %908 = vmatprep.mubr.bf16.mxu0 0
        %909 = vmatmul.mubr.bf16.gmra.mrb[0].mxu0 %v796
        %v910 = vpop.f32.mrb[0].mxu0
        %v911 = vadd.f32 %v818, %v910
        %v912 = vpop.f32.mrb[0].mxu0
        %v913 = vpop.f32.mrb[0].mxu0
        %v914 = vadd.f32 %v818, %v913
        %v915 = vpop.f32.mrb[0].mxu0
        %916 = vdwg.mxu0
        %vm917 = vcmask 31744
        %918 = vst.msk [vmem:[%s411] sm:$0xff] %vm917, %v903
        %919 = vst.msk [vmem:[%s411 + $0x8] sm:$0xff] %vm917, %v906
        %920 = vst.msk [vmem:[%s411 + $0x10] sm:$0xff] %vm917, %v911
        %921 = vst.msk [vmem:[%s411 + $0x18] sm:$0xff] %vm917, %v914
        %s922 = smul.u32 4, %s25
        %p923 = scmp.lt.s32.totalorder %s922, 7
        %s924 = scalar_select %p923, %s922, 7
        %s925 = smul.addr %s924, 8
        %s926 = scalar_lea.vmem %s9, %s925
        // Predicated region
        $region77: #{tpu_custom_call.1} parent=55 // pred_check
          %p927 = pneg %p237
        $region78: #{tpu_custom_call.1} parent=55 // pred_check_branch
          %929 = sbr.rel (%p927) target = $region80
        $region79: #{tpu_custom_call.1} parent=55 // pred_region
          %s930 = smul.u32 4, %s25
        $region80: #{tpu_custom_call.1} parent=55 // pred_fallthru
          _
      $region56: #{tpu_custom_call.1} parent=5 // pred_fallthru
        _
      %p931 = scmp.le.s32.totalorder 2, %s20
      // Predicated region
      $region81: #{tpu_custom_call.1} parent=5 // pred_check
        %p932 = pneg %p931
      $region82: #{tpu_custom_call.1} parent=5 // pred_check_branch
        %934 = sbr.rel (%p932) target = $region84
      $region83: #{tpu_custom_call.1} parent=5 // pred_region
        %s935 = ssub.s32 %s20, 2
        // Predicated region
        $region85: #{tpu_custom_call.1} parent=83 // pred_check
          %p936 = pneg %p243
        $region86: #{tpu_custom_call.1} parent=83 // pred_check_branch
          %938 = sbr.rel (%p936) target = $region88
        $region87: #{tpu_custom_call.1} parent=83 // pred_region
          %s939 = smul.u32 4, %s26
          %p940 = scmp.lt.s32.totalorder %s939, 7
          %s941 = scalar_select %p940, %s939, 7
          %s942 = smul.addr %s941, 8
          %s943 = scalar_lea.vmem %s9, %s942
        $region88: #{tpu_custom_call.1} parent=83 // pred_fallthru
          _
      $region84: #{tpu_custom_call.1} parent=5 // pred_fallthru
        _
    $region6: #{tpu_custom_call.1} parent=1 // loop_footer
      %s24 = sadd.s32 1, %s20
    $region7: #{tpu_custom_call.1} parent=1 // loop_footer_branch
      %19 = sbr.rel target = $region3
    $region8: #{tpu_custom_call.1} parent=1 // loop_exit
      _
    %944 = vsyncpa [#allocation3], 1
    %s945 = scalar_lea.sflag [#allocation3], 1
    %946 = vsyncpa %s945, 1
    %947 = vsyncpa [#allocation5], 1
    %948 = vsyncpa [#allocation8], 1

</llo_original>
